<compile_context>
chip_gen: v7x
topology: tpu7x:2x2x1
jax: 0.10.0
libtpu: 0.0.40
codegen_flags: <defaults>
</compile_context>

<pallas_src>
import math

import jax
import jax.numpy as jnp
from jax.experimental import pallas as pl
from jax.experimental.pallas import tpu as pltpu

LANE = 128


# ---------------------------------------------------------------------------
# Helpers
# ---------------------------------------------------------------------------

def _round_up(x, m):
    return ((x + m - 1) // m) * m


def _apply_activation(y, activation):
    if activation is None:
        return y
    if activation == "sin":
        return jnp.sin(y)
    if activation == "relu":
        return jnp.maximum(y, 0.0)
    if activation == "tanh":
        return jnp.tanh(y)
    raise ValueError(f"Activation '{activation}' is not supported.")


# ---------------------------------------------------------------------------
# Fused kernel: whole MLP for one (tile_rows, pack*in) tile of packed coords.
# ---------------------------------------------------------------------------

def _make_fused_kernel(layer_defs):
    """layer_defs: tuple of (has_bias, activation, use_vpu).  Omega is already
    folded into the packed (block-diagonal, pre-transposed) weights/biases."""

    def kernel(*refs):
        x_ref = refs[0]
        o_ref = refs[-1]
        param_refs = refs[1:-1]

        h = x_ref[...].astype(jnp.float32)
        idx = 0
        for has_bias, act, use_vpu in layer_defs:
            w = param_refs[idx][...]
            idx += 1
            if use_vpu:
                # Tiny contraction dim (pack*in_features): a handful of VPU
                # rank-1 broadcast FMAs beats an MXU matmul that is ~0 in K.
                y = h[:, 0:1] * w[0:1, :]
                for j in range(1, w.shape[0]):
                    y = y + h[:, j:j+1] * w[j:j+1, :]
            else:
                y = jnp.dot(h, w, preferred_element_type=jnp.float32)
            if has_bias:
                y = y + param_refs[idx][...]          # (1, cols) broadcast
                idx += 1
            h = _apply_activation(y, act)

        ow = o_ref.shape[-1]                          # narrow (masked) store
        o_ref[...] = h[:, :ow].astype(o_ref.dtype)

    return kernel


# ---------------------------------------------------------------------------
# Parameter construction (mirrors SingleLayer.init_weights) and preparation:
# transpose to (in, out), fold omega, pack `pack` points per 128 lanes with
# block-diagonal weights, pad the packed hidden width to a lane multiple.
# ---------------------------------------------------------------------------

def init_siren_params(key, in_features, out_features, hidden_features,
                      hidden_layers, activation):
    params = []
    dims = [(in_features, hidden_features, True, True)]            # first layer
    dims += [(hidden_features, hidden_features, True, False)] * hidden_layers
    dims += [(hidden_features, out_features, False, False)]        # final layer
    layer_activations = [activation] * (1 + hidden_layers) + [None]

    for (fan_in, fan_out, has_bias, is_first), act in zip(dims, layer_activations):
        omega = 30.0 if act == "sin" else 1.0
        key, wk, bk = jax.random.split(key, 3)
        if is_first:
            bound = 1.0 / fan_in
        else:
            bound = math.sqrt(6.0 / fan_in) / omega
        w = jax.random.uniform(wk, (fan_out, fan_in), jnp.float32,
                               minval=-bound, maxval=bound)
        if has_bias:
            # PyTorch nn.Linear default bias init: U(-1/sqrt(fan_in), 1/sqrt(fan_in))
            b_bound = 1.0 / math.sqrt(fan_in)
            b = jax.random.uniform(bk, (fan_out,), jnp.float32,
                                   minval=-b_bound, maxval=b_bound)
        else:
            b = None
        params.append({"w": w, "b": b, "omega": omega, "activation": act})
    return params


def prepare_siren_params(params):
    in_features = params[0]["w"].shape[1]
    hidden = params[0]["w"].shape[0]
    out_features = params[-1]["w"].shape[0]

    # Pack as many points per 128-lane row as the hidden width allows.
    pack = max(1, LANE // hidden) if hidden <= LANE else 1
    h_pad = _round_up(pack * hidden, LANE)            # packed hidden width
    in_p = pack * in_features                         # packed input width
    out_p = pack * out_features                       # packed (real) output width
    out_cols = _round_up(out_p, LANE)                 # last-layer matmul width

    flat = []
    layer_defs = []
    n_layers = len(params)
    for li, layer in enumerate(params):
        w = jnp.asarray(layer["w"], jnp.float32)      # (fan_out, fan_in)
        wt = w.T * layer["omega"]                     # (fan_in, fan_out), omega folded
        fan_in, fan_out = wt.shape
        is_first = (li == 0)
        is_last = (li == n_layers - 1)
        w_rows = in_p if is_first else h_pad
        w_cols = out_cols if is_last else h_pad

        # Block-diagonal packing: pack independent copies along the diagonal.
        wp = jnp.zeros((w_rows, w_cols), jnp.float32)
        for i in range(pack):
            wp = wp.at[i * fan_in:(i + 1) * fan_in,
                       i * fan_out:(i + 1) * fan_out].set(wt)
        flat.append(wp)

        has_bias = layer["b"] is not None
        if has_bias:
            b = jnp.asarray(layer["b"], jnp.float32) * layer["omega"]
            bp = jnp.tile(b, pack)
            bp = jnp.pad(bp, (0, w_cols - bp.shape[0])).reshape(1, w_cols)
            flat.append(bp)

        use_vpu = is_first and w_rows <= 16           # rank-1 FMA path for tiny K
        layer_defs.append((has_bias, layer["activation"], use_vpu))

    meta = {"f_in": in_features, "f_out": out_features, "pack": pack,
            "in_p": in_p, "out_p": out_p}
    return flat, tuple(layer_defs), meta


# ---------------------------------------------------------------------------
# Fused forward pass
# ---------------------------------------------------------------------------

def siren_forward_fused(flat_params, layer_defs, meta, coords, *, tile_pts=8192):
    n, f_in = coords.shape
    assert f_in == meta["f_in"]
    pack = meta["pack"]
    in_p = meta["in_p"]
    out_p = meta["out_p"]
    f_out = meta["f_out"]

    # Pad the point count only to a multiple of the pack factor (<= pack-1 rows).
    n_grp = _round_up(n, pack)
    x = coords if n_grp == n else jnp.pad(coords, ((0, n_grp - n), (0, 0)))
    # Contiguous (free) reshape: `pack` consecutive points share one row.
    xp = x.reshape(n_grp // pack, in_p)
    rows = xp.shape[0]

    # Rows per grid step: multiple of 8, capped by tile_pts and by the data.
    tile_rows = min(max(tile_pts // pack, 8), _round_up(rows, 8))
    tile_rows = _round_up(tile_rows, 8)
    # Prefer >= 2 grid steps when there is enough data (both v7x TensorCores).
    if rows >= 16 and pl.cdiv(rows, tile_rows) < 2:
        tile_rows = _round_up(pl.cdiv(rows, 2), 8)
    grid = (pl.cdiv(rows, tile_rows),)                # partial last block is masked

    in_specs = [pl.BlockSpec((tile_rows, in_p), lambda i: (i, 0))]
    for p in flat_params:
        # Constant index_map: weights/biases stay VMEM-resident across the grid.
        in_specs.append(pl.BlockSpec(p.shape, lambda i: (0, 0)))

    # Advisory cost estimate for XLA's scheduler.
    flops = 0
    transcendentals = 0
    bytes_accessed = xp.size * 4 + rows * out_p * 4
    idx = 0
    for has_bias, act, _ in layer_defs:
        w = flat_params[idx]
        idx += 1
        flops += 2 * rows * w.shape[0] * w.shape[1]
        bytes_accessed += w.size * 4
        if has_bias:
            bytes_accessed += flat_params[idx].size * 4
            idx += 1
        if act in ("sin", "tanh"):
            transcendentals += rows * w.shape[1]
    cost = pl.CostEstimate(flops=int(flops), transcendentals=int(transcendentals),
                           bytes_accessed=int(bytes_accessed))

    out = pl.pallas_call(
        _make_fused_kernel(layer_defs),
        out_shape=jax.ShapeDtypeStruct((rows, out_p), coords.dtype),
        grid=grid,
        in_specs=in_specs,
        out_specs=pl.BlockSpec((tile_rows, out_p), lambda i: (i, 0)),
        compiler_params=pltpu.CompilerParams(
            dimension_semantics=("parallel",),         # megacore on v7x
            vmem_limit_bytes=48 * 1024 * 1024,         # < 64 MiB (v7x physical)
        ),
        cost_estimate=cost,
    )(xp, *flat_params)

    # Contiguous (free) unpack reshape; slice off the tiny pack-alignment pad.
    out = out.reshape(n_grp, f_out)
    return out if n_grp == n else out[:n]


# ---------------------------------------------------------------------------
# Pure-JAX reference for sanity checking
# ---------------------------------------------------------------------------

def siren_forward_ref(params, coords):
    x = coords
    for layer in params:
        y = x @ layer["w"].T
        if layer["b"] is not None:
            y = y + layer["b"]
        y = y * layer["omega"]
        x = _apply_activation(y, layer["activation"])
    return x


if __name__ == "__main__":
    # Classic SIREN: 2-D coords -> 3 channels, hidden width 32, 2 hidden layers.
    in_features, out_features = 2, 3
    hidden_features, hidden_layers = 32, 2
    activation = "sin"

    key = jax.random.PRNGKey(0)
    pkey, xkey = jax.random.split(key)

    params = init_siren_params(pkey, in_features, out_features,
                               hidden_features, hidden_layers, activation)
    flat_params, layer_defs, meta = prepare_siren_params(params)

    # Case 1: small input, 2-step grid.
    coords = jax.random.uniform(xkey, (64, in_features), jnp.float32,
                                minval=-1.0, maxval=1.0)
    out = jax.block_until_ready(
        siren_forward_fused(flat_params, layer_defs, meta, coords))
    ref = siren_forward_ref(params, coords)
    assert out.shape == (64, out_features)
    assert jnp.allclose(out, ref, atol=1e-4, rtol=1e-4), "mismatch vs reference (case 1)"

    # Case 2: N not a multiple of tile or pack -> pack-alignment pad, multi-step
    # grid, and a masked partial last block.
    coords2 = jax.random.uniform(jax.random.PRNGKey(1), (301, in_features),
                                 jnp.float32, minval=-1.0, maxval=1.0)
    out2 = jax.block_until_ready(
        siren_forward_fused(flat_params, layer_defs, meta, coords2, tile_pts=128))
    ref2 = siren_forward_ref(params, coords2)
    assert out2.shape == (301, out_features)
    assert jnp.allclose(out2, ref2, atol=1e-4, rtol=1e-4), "mismatch vs reference (case 2)"

    # TODO(synk): optional bf16 MXU inputs for the hidden matmuls (keep f32
    # accumulation / sin) once accuracy with omega-folded weights is validated.
    print("KERNEL_OK")
</pallas_src>

<mosaic_0001>
module attributes {stable_mosaic.version = 11 : i64} {
  func.func @kernel(%arg0: i32, %arg1: memref<8x8xf32, #tpu.memory_space<vmem>>, %arg2: memref<8x128xf32, #tpu.memory_space<vmem>>, %arg3: memref<1x128xf32, #tpu.memory_space<vmem>>, %arg4: memref<128x128xf32, #tpu.memory_space<vmem>>, %arg5: memref<1x128xf32, #tpu.memory_space<vmem>>, %arg6: memref<128x128xf32, #tpu.memory_space<vmem>>, %arg7: memref<1x128xf32, #tpu.memory_space<vmem>>, %arg8: memref<128x128xf32, #tpu.memory_space<vmem>>, %arg9: memref<8x12xf32, #tpu.memory_space<vmem>>) attributes {dimension_semantics = [#tpu.dimension_semantics<parallel>], iteration_bounds = array<i64: 2>, scalar_prefetch = 0 : i64, scratch_operands = 0 : i64, tpu.core_type = #tpu.core_type<tc>, window_params = [{transform_indices = @transform_0, window_bounds = array<i64: 8, 8>}, {pipeline_mode = #tpu.pipeline_mode<synchronous>, transform_indices = @transform_1, window_bounds = array<i64: 8, 128>}, {pipeline_mode = #tpu.pipeline_mode<synchronous>, transform_indices = @transform_2, window_bounds = array<i64: 1, 128>}, {pipeline_mode = #tpu.pipeline_mode<synchronous>, transform_indices = @transform_3, window_bounds = array<i64: 128, 128>}, {pipeline_mode = #tpu.pipeline_mode<synchronous>, transform_indices = @transform_4, window_bounds = array<i64: 1, 128>}, {pipeline_mode = #tpu.pipeline_mode<synchronous>, transform_indices = @transform_5, window_bounds = array<i64: 128, 128>}, {pipeline_mode = #tpu.pipeline_mode<synchronous>, transform_indices = @transform_6, window_bounds = array<i64: 1, 128>}, {pipeline_mode = #tpu.pipeline_mode<synchronous>, transform_indices = @transform_7, window_bounds = array<i64: 128, 128>}, {transform_indices = @transform_8, window_bounds = array<i64: 8, 12>}]} {
    %c0 = arith.constant 0 : index
    %c0_0 = arith.constant 0 : index
    %0 = vector.load %arg1[%c0, %c0_0] : memref<8x8xf32, #tpu.memory_space<vmem>>, vector<8x8xf32>
    %c0_1 = arith.constant 0 : index
    %c0_2 = arith.constant 0 : index
    %1 = vector.load %arg2[%c0_1, %c0_2] : memref<8x128xf32, #tpu.memory_space<vmem>>, vector<8x128xf32>
    %2 = vector.extract_strided_slice %0 {offsets = [0, 0], sizes = [8, 1], strides = [1, 1]} : vector<8x8xf32> to vector<8x1xf32>
    %3 = vector.extract_strided_slice %1 {offsets = [0, 0], sizes = [1, 128], strides = [1, 1]} : vector<8x128xf32> to vector<1x128xf32>
    %4 = vector.broadcast %2 : vector<8x1xf32> to vector<8x128xf32>
    %5 = vector.broadcast %3 : vector<1x128xf32> to vector<8x128xf32>
    %6 = arith.mulf %4, %5 : vector<8x128xf32>
    %7 = vector.extract_strided_slice %0 {offsets = [0, 1], sizes = [8, 1], strides = [1, 1]} : vector<8x8xf32> to vector<8x1xf32>
    %8 = vector.extract_strided_slice %1 {offsets = [1, 0], sizes = [1, 128], strides = [1, 1]} : vector<8x128xf32> to vector<1x128xf32>
    %9 = vector.broadcast %7 : vector<8x1xf32> to vector<8x128xf32>
    %10 = vector.broadcast %8 : vector<1x128xf32> to vector<8x128xf32>
    %11 = arith.mulf %9, %10 : vector<8x128xf32>
    %12 = arith.addf %6, %11 : vector<8x128xf32>
    %13 = vector.extract_strided_slice %0 {offsets = [0, 2], sizes = [8, 1], strides = [1, 1]} : vector<8x8xf32> to vector<8x1xf32>
    %14 = vector.extract_strided_slice %1 {offsets = [2, 0], sizes = [1, 128], strides = [1, 1]} : vector<8x128xf32> to vector<1x128xf32>
    %15 = vector.broadcast %13 : vector<8x1xf32> to vector<8x128xf32>
    %16 = vector.broadcast %14 : vector<1x128xf32> to vector<8x128xf32>
    %17 = arith.mulf %15, %16 : vector<8x128xf32>
    %18 = arith.addf %12, %17 : vector<8x128xf32>
    %19 = vector.extract_strided_slice %0 {offsets = [0, 3], sizes = [8, 1], strides = [1, 1]} : vector<8x8xf32> to vector<8x1xf32>
    %20 = vector.extract_strided_slice %1 {offsets = [3, 0], sizes = [1, 128], strides = [1, 1]} : vector<8x128xf32> to vector<1x128xf32>
    %21 = vector.broadcast %19 : vector<8x1xf32> to vector<8x128xf32>
    %22 = vector.broadcast %20 : vector<1x128xf32> to vector<8x128xf32>
    %23 = arith.mulf %21, %22 : vector<8x128xf32>
    %24 = arith.addf %18, %23 : vector<8x128xf32>
    %25 = vector.extract_strided_slice %0 {offsets = [0, 4], sizes = [8, 1], strides = [1, 1]} : vector<8x8xf32> to vector<8x1xf32>
    %26 = vector.extract_strided_slice %1 {offsets = [4, 0], sizes = [1, 128], strides = [1, 1]} : vector<8x128xf32> to vector<1x128xf32>
    %27 = vector.broadcast %25 : vector<8x1xf32> to vector<8x128xf32>
    %28 = vector.broadcast %26 : vector<1x128xf32> to vector<8x128xf32>
    %29 = arith.mulf %27, %28 : vector<8x128xf32>
    %30 = arith.addf %24, %29 : vector<8x128xf32>
    %31 = vector.extract_strided_slice %0 {offsets = [0, 5], sizes = [8, 1], strides = [1, 1]} : vector<8x8xf32> to vector<8x1xf32>
    %32 = vector.extract_strided_slice %1 {offsets = [5, 0], sizes = [1, 128], strides = [1, 1]} : vector<8x128xf32> to vector<1x128xf32>
    %33 = vector.broadcast %31 : vector<8x1xf32> to vector<8x128xf32>
    %34 = vector.broadcast %32 : vector<1x128xf32> to vector<8x128xf32>
    %35 = arith.mulf %33, %34 : vector<8x128xf32>
    %36 = arith.addf %30, %35 : vector<8x128xf32>
    %37 = vector.extract_strided_slice %0 {offsets = [0, 6], sizes = [8, 1], strides = [1, 1]} : vector<8x8xf32> to vector<8x1xf32>
    %38 = vector.extract_strided_slice %1 {offsets = [6, 0], sizes = [1, 128], strides = [1, 1]} : vector<8x128xf32> to vector<1x128xf32>
    %39 = vector.broadcast %37 : vector<8x1xf32> to vector<8x128xf32>
    %40 = vector.broadcast %38 : vector<1x128xf32> to vector<8x128xf32>
    %41 = arith.mulf %39, %40 : vector<8x128xf32>
    %42 = arith.addf %36, %41 : vector<8x128xf32>
    %43 = vector.extract_strided_slice %0 {offsets = [0, 7], sizes = [8, 1], strides = [1, 1]} : vector<8x8xf32> to vector<8x1xf32>
    %44 = vector.extract_strided_slice %1 {offsets = [7, 0], sizes = [1, 128], strides = [1, 1]} : vector<8x128xf32> to vector<1x128xf32>
    %45 = vector.broadcast %43 : vector<8x1xf32> to vector<8x128xf32>
    %46 = vector.broadcast %44 : vector<1x128xf32> to vector<8x128xf32>
    %47 = arith.mulf %45, %46 : vector<8x128xf32>
    %48 = arith.addf %42, %47 : vector<8x128xf32>
    %c0_3 = arith.constant 0 : index
    %c0_4 = arith.constant 0 : index
    %49 = vector.load %arg3[%c0_3, %c0_4] : memref<1x128xf32, #tpu.memory_space<vmem>>, vector<1x128xf32>
    %50 = vector.broadcast %49 : vector<1x128xf32> to vector<8x128xf32>
    %51 = arith.addf %48, %50 : vector<8x128xf32>
    %52 = math.sin %51 : vector<8x128xf32>
    %c0_5 = arith.constant 0 : index
    %c0_6 = arith.constant 0 : index
    %53 = vector.load %arg4[%c0_5, %c0_6] : memref<128x128xf32, #tpu.memory_space<vmem>>, vector<128x128xf32>
    %cst = arith.constant dense<0.000000e+00> : vector<8x128xf32>
    %54 = tpu.matmul %52, %53, %cst {dimension_numbers = #tpu.dot_dimension_numbers<[1], [0], [0], [1], [0, 0, 1, 1], [], []>} : vector<8x128xf32>, vector<128x128xf32>, vector<8x128xf32> -> vector<8x128xf32>
    %c0_7 = arith.constant 0 : index
    %c0_8 = arith.constant 0 : index
    %55 = vector.load %arg5[%c0_7, %c0_8] : memref<1x128xf32, #tpu.memory_space<vmem>>, vector<1x128xf32>
    %56 = vector.broadcast %55 : vector<1x128xf32> to vector<8x128xf32>
    %57 = arith.addf %54, %56 : vector<8x128xf32>
    %58 = math.sin %57 : vector<8x128xf32>
    %c0_9 = arith.constant 0 : index
    %c0_10 = arith.constant 0 : index
    %59 = vector.load %arg6[%c0_9, %c0_10] : memref<128x128xf32, #tpu.memory_space<vmem>>, vector<128x128xf32>
    %cst_11 = arith.constant dense<0.000000e+00> : vector<8x128xf32>
    %60 = tpu.matmul %58, %59, %cst_11 {dimension_numbers = #tpu.dot_dimension_numbers<[1], [0], [0], [1], [0, 0, 1, 1], [], []>} : vector<8x128xf32>, vector<128x128xf32>, vector<8x128xf32> -> vector<8x128xf32>
    %c0_12 = arith.constant 0 : index
    %c0_13 = arith.constant 0 : index
    %61 = vector.load %arg7[%c0_12, %c0_13] : memref<1x128xf32, #tpu.memory_space<vmem>>, vector<1x128xf32>
    %62 = vector.broadcast %61 : vector<1x128xf32> to vector<8x128xf32>
    %63 = arith.addf %60, %62 : vector<8x128xf32>
    %64 = math.sin %63 : vector<8x128xf32>
    %c0_14 = arith.constant 0 : index
    %c0_15 = arith.constant 0 : index
    %65 = vector.load %arg8[%c0_14, %c0_15] : memref<128x128xf32, #tpu.memory_space<vmem>>, vector<128x128xf32>
    %cst_16 = arith.constant dense<0.000000e+00> : vector<8x128xf32>
    %66 = tpu.matmul %64, %65, %cst_16 {dimension_numbers = #tpu.dot_dimension_numbers<[1], [0], [0], [1], [0, 0, 1, 1], [], []>} : vector<8x128xf32>, vector<128x128xf32>, vector<8x128xf32> -> vector<8x128xf32>
    %67 = vector.extract_strided_slice %66 {offsets = [0, 0], sizes = [8, 12], strides = [1, 1]} : vector<8x128xf32> to vector<8x12xf32>
    %c0_17 = arith.constant 0 : index
    %c0_18 = arith.constant 0 : index
    %68 = vector.load %arg9[%c0_17, %c0_18] : memref<8x12xf32, #tpu.memory_space<vmem>>, vector<8x12xf32>
    tpu.vector_store %arg9[%c0_17, %c0_18], %67 {strides = array<i32>} : memref<8x12xf32, #tpu.memory_space<vmem>>, vector<8x12xf32>,
    return
  }
  func.func @transform_0(%arg0: i32) -> (i32, i32) {
    %c0_i32 = arith.constant 0 : i32
    %c0_i32_0 = arith.constant 0 : i32
    return %arg0, %c0_i32 : i32, i32
  }
  func.func @transform_1(%arg0: i32) -> (i32, i32) {
    %c0_i32 = arith.constant 0 : i32
    %c0_i32_0 = arith.constant 0 : i32
    %c0_i32_1 = arith.constant 0 : i32
    return %c0_i32, %c0_i32_0 : i32, i32
  }
  func.func @transform_2(%arg0: i32) -> (i32, i32) {
    %c0_i32 = arith.constant 0 : i32
    %c0_i32_0 = arith.constant 0 : i32
    %c0_i32_1 = arith.constant 0 : i32
    return %c0_i32, %c0_i32_0 : i32, i32
  }
  func.func @transform_3(%arg0: i32) -> (i32, i32) {
    %c0_i32 = arith.constant 0 : i32
    %c0_i32_0 = arith.constant 0 : i32
    %c0_i32_1 = arith.constant 0 : i32
    return %c0_i32, %c0_i32_0 : i32, i32
  }
  func.func @transform_4(%arg0: i32) -> (i32, i32) {
    %c0_i32 = arith.constant 0 : i32
    %c0_i32_0 = arith.constant 0 : i32
    %c0_i32_1 = arith.constant 0 : i32
    return %c0_i32, %c0_i32_0 : i32, i32
  }
  func.func @transform_5(%arg0: i32) -> (i32, i32) {
    %c0_i32 = arith.constant 0 : i32
    %c0_i32_0 = arith.constant 0 : i32
    %c0_i32_1 = arith.constant 0 : i32
    return %c0_i32, %c0_i32_0 : i32, i32
  }
  func.func @transform_6(%arg0: i32) -> (i32, i32) {
    %c0_i32 = arith.constant 0 : i32
    %c0_i32_0 = arith.constant 0 : i32
    %c0_i32_1 = arith.constant 0 : i32
    return %c0_i32, %c0_i32_0 : i32, i32
  }
  func.func @transform_7(%arg0: i32) -> (i32, i32) {
    %c0_i32 = arith.constant 0 : i32
    %c0_i32_0 = arith.constant 0 : i32
    %c0_i32_1 = arith.constant 0 : i32
    return %c0_i32, %c0_i32_0 : i32, i32
  }
  func.func @transform_8(%arg0: i32) -> (i32, i32) {
    %c0_i32 = arith.constant 0 : i32
    %c0_i32_0 = arith.constant 0 : i32
    return %arg0, %c0_i32 : i32, i32
  }
}

</mosaic_0001>

<llo_original>
// kernel: tpu_custom_call.1
$region0: #{tpu_custom_call.1}
  #allocation0 [shape = 'u32[]', space=smem, size = 0x4, offset = 0x4, fixed_abs, tag = 'smem constant byte address 0x4 - core index']
  #allocation1 [shape = 'u32[144,128]{1,0:T(1,128)}', space=vmem, size = 0x12000, scoped, tag = 'internal scratch']
  %s0 = inlined_call_operand.vmem [shape: f32[16,8], index: 0, kind: input, shape index: {}]
  %s1 = inlined_call_operand.vmem [shape: f32[8,128], index: 1, kind: input, shape index: {}]
  %s2 = inlined_call_operand.vmem [shape: f32[1,128], index: 2, kind: input, shape index: {}]
  %s3 = inlined_call_operand.hbm [shape: f32[128,128], index: 3, kind: input, shape index: {}]
  %s4 = inlined_call_operand.vmem [shape: f32[1,128], index: 4, kind: input, shape index: {}]
  %s5 = inlined_call_operand.hbm [shape: f32[128,128], index: 5, kind: input, shape index: {}]
  %s6 = inlined_call_operand.vmem [shape: f32[1,128], index: 6, kind: input, shape index: {}]
  %s7 = inlined_call_operand.hbm [shape: f32[128,128], index: 7, kind: input, shape index: {}]
  %s8 = inlined_call_operand.hbm [shape: f32[16,12], index: 8, kind: output, shape index: {}]
  %s9 = sld [smem:[#allocation0]]
  $region77: #{tpu_custom_call.1} parent=0
    _
  %s11 = ssub.s32 1, %s9
  %s12 = scalar_select 0, %s11, %s9
  $region1: #{tpu_custom_call.1} parent=0
    #allocation2 [shape = 'u8[65536]{0}', space=vmem, size = 0x10000, scoped, tag = 'input window, operand 3, single buffered']
    #allocation3 [shape = 's32[2]{0}', space=sflag, size = 0x8, scoped, tag = 'scoped memory for tpu_custom_call.1']
    #allocation4 [shape = 's32[2]{0}', space=sflag, size = 0x8, scoped, tag = 'scoped memory for tpu_custom_call.1']
    #allocation5 [shape = 'u8[65536]{0}', space=vmem, size = 0x10000, scoped, tag = 'input window, operand 5, single buffered']
    #allocation6 [shape = 's32[1]{0}', space=sflag, size = 0x4, scoped, tag = 'scoped memory for tpu_custom_call.1']
    #allocation7 [shape = 'u8[65536]{0}', space=vmem, size = 0x10000, scoped, tag = 'input window, operand 7, single buffered']
    #allocation8 [shape = 'u8[8192]{0}', space=vmem, size = 0x2000, scoped, tag = 'output window, operand 0']
    %13 = vsyncpa [#allocation3], 0
    %14 = vsyncpa [#allocation6], 0
    %15 = vsyncpa [#allocation4], 0
    %s16 = scalar_lea.sflag [#allocation4], 1
    %17 = vsyncpa %s16, 0
    loop: start=0, step=1, limit=4
    $region2: #{tpu_custom_call.1} parent=1 // loop_pre_header
      _
    $region3: #{tpu_custom_call.1} parent=1 // loop_header
      %s19 = sphi 0, %s23
      %p20 = scmp.ge.s32.totalorder %s19, 4
      %s29 = sphi 0, %s31
      %s32 = sphi 0, %s29
      %s33 = sphi 0, %s32
      %s49 = sphi 0, %s33
      %s53 = sphi 0, %s53
      %s55 = sphi 0, %s53
      %s56 = sphi 0, %s55
      %s70 = sphi 0, %s56
      %s74 = sphi 0, %s74
      %s76 = sphi 0, %s74
      %s77 = sphi 0, %s76
      %s91 = sphi 0, %s77
      %s95 = sphi 0, %s95
      %s97 = sphi 0, %s95
      %s98 = sphi 0, %s97
      %s112 = sphi 0, %s98
      %s116 = sphi 0, %s116
      %s118 = sphi 0, %s116
      %s119 = sphi 0, %s118
      %s133 = sphi 0, %s119
      %s137 = sphi 0, %s137
      %s139 = sphi 0, %s137
      %s140 = sphi 0, %s139
      %s154 = sphi 0, %s140
      %s158 = sphi 0, %s158
      %s160 = sphi 0, %s158
      %s161 = sphi 0, %s160
      %s175 = sphi 0, %s161
      %s179 = sphi 0, %s179
      %s181 = sphi 0, %s179
      %s182 = sphi 0, %s181
      %s196 = sphi 0, %s182
      %s202 = sphi 0, %s204
      %s205 = sphi 0, %s202
      %s206 = sphi 0, %s205
      %s222 = sphi 0, %s206
    $region4: #{tpu_custom_call.1} parent=1 // loop_header_branch
      %22 = sbr.rel (%p20) target = $region8
    $region5: #{tpu_custom_call.1} parent=1 // loop_body
      %s24 = ssub.s32 %s19, 1
      %s25 = ssub.s32 %s19, 2
      %s26 = sadd.s32 %s19, 1
      %s27 = ssub.s32 %s19, %s26
      %p28 = scmp.eq.s32.totalorder %s27, 0
      %s30 = sadd.s32 %s29, 1
      %s31 = scalar_select %p28, %s29, %s30
      %p34 = pneg %p28
      %p35 = scmp.eq.s32.totalorder %s19, 1
      %p36 = por %p34, %p35
      %p37 = scmp.ne.s32.totalorder %s29, %s32
      %p38 = scmp.eq.s32.totalorder %s19, 0
      %p39 = por %p37, %p38
      %p40 = scmp.ne.s32.totalorder %s29, %s32
      %p41 = scmp.eq.s32.totalorder %s24, 1
      %p42 = por %p40, %p41
      %p43 = scmp.ne.s32.totalorder %s32, %s33
      %p44 = scmp.eq.s32.totalorder %s24, 0
      %p45 = por %p43, %p44
      %p46 = scmp.ne.s32.totalorder %s32, %s33
      %p47 = scmp.eq.s32.totalorder %s25, 1
      %p48 = por %p46, %p47
      %p50 = scmp.ne.s32.totalorder %s33, %s49
      %p51 = scmp.eq.s32.totalorder %s25, 0
      %p52 = por %p50, %p51
      %s54 = sadd.s32 %s53, 1
      %p57 = scmp.eq.s32.totalorder %s19, 1
      %p58 = scmp.ne.s32.totalorder %s53, %s55
      %p59 = scmp.eq.s32.totalorder %s19, 0
      %p60 = por %p58, %p59
      %p61 = scmp.ne.s32.totalorder %s53, %s55
      %p62 = scmp.eq.s32.totalorder %s24, 1
      %p63 = por %p61, %p62
      %p64 = scmp.ne.s32.totalorder %s55, %s56
      %p65 = scmp.eq.s32.totalorder %s24, 0
      %p66 = por %p64, %p65
      %p67 = scmp.ne.s32.totalorder %s55, %s56
      %p68 = scmp.eq.s32.totalorder %s25, 1
      %p69 = por %p67, %p68
      %p71 = scmp.ne.s32.totalorder %s56, %s70
      %p72 = scmp.eq.s32.totalorder %s25, 0
      %p73 = por %p71, %p72
      %s75 = sadd.s32 %s74, 1
      %p78 = scmp.eq.s32.totalorder %s19, 1
      %p79 = scmp.ne.s32.totalorder %s74, %s76
      %p80 = scmp.eq.s32.totalorder %s19, 0
      %p81 = por %p79, %p80
      %p82 = scmp.ne.s32.totalorder %s74, %s76
      %p83 = scmp.eq.s32.totalorder %s24, 1
      %p84 = por %p82, %p83
      %p85 = scmp.ne.s32.totalorder %s76, %s77
      %p86 = scmp.eq.s32.totalorder %s24, 0
      %p87 = por %p85, %p86
      %p88 = scmp.ne.s32.totalorder %s76, %s77
      %p89 = scmp.eq.s32.totalorder %s25, 1
      %p90 = por %p88, %p89
      %p92 = scmp.ne.s32.totalorder %s77, %s91
      %p93 = scmp.eq.s32.totalorder %s25, 0
      %p94 = por %p92, %p93
      %s96 = sadd.s32 %s95, 1
      %p99 = scmp.eq.s32.totalorder %s19, 1
      %p100 = scmp.ne.s32.totalorder %s95, %s97
      %p101 = scmp.eq.s32.totalorder %s19, 0
      %p102 = por %p100, %p101
      %p103 = scmp.ne.s32.totalorder %s95, %s97
      %p104 = scmp.eq.s32.totalorder %s24, 1
      %p105 = por %p103, %p104
      %p106 = scmp.ne.s32.totalorder %s97, %s98
      %p107 = scmp.eq.s32.totalorder %s24, 0
      %p108 = por %p106, %p107
      %p109 = scmp.ne.s32.totalorder %s97, %s98
      %p110 = scmp.eq.s32.totalorder %s25, 1
      %p111 = por %p109, %p110
      %p113 = scmp.ne.s32.totalorder %s98, %s112
      %p114 = scmp.eq.s32.totalorder %s25, 0
      %p115 = por %p113, %p114
      %s117 = sadd.s32 %s116, 1
      %p120 = scmp.eq.s32.totalorder %s19, 1
      %p121 = scmp.ne.s32.totalorder %s116, %s118
      %p122 = scmp.eq.s32.totalorder %s19, 0
      %p123 = por %p121, %p122
      %p124 = scmp.ne.s32.totalorder %s116, %s118
      %p125 = scmp.eq.s32.totalorder %s24, 1
      %p126 = por %p124, %p125
      %p127 = scmp.ne.s32.totalorder %s118, %s119
      %p128 = scmp.eq.s32.totalorder %s24, 0
      %p129 = por %p127, %p128
      %p130 = scmp.ne.s32.totalorder %s118, %s119
      %p131 = scmp.eq.s32.totalorder %s25, 1
      %p132 = por %p130, %p131
      %p134 = scmp.ne.s32.totalorder %s119, %s133
      %p135 = scmp.eq.s32.totalorder %s25, 0
      %p136 = por %p134, %p135
      %s138 = sadd.s32 %s137, 1
      %p141 = scmp.eq.s32.totalorder %s19, 1
      %p142 = scmp.ne.s32.totalorder %s137, %s139
      %p143 = scmp.eq.s32.totalorder %s19, 0
      %p144 = por %p142, %p143
      %p145 = scmp.ne.s32.totalorder %s137, %s139
      %p146 = scmp.eq.s32.totalorder %s24, 1
      %p147 = por %p145, %p146
      %p148 = scmp.ne.s32.totalorder %s139, %s140
      %p149 = scmp.eq.s32.totalorder %s24, 0
      %p150 = por %p148, %p149
      %p151 = scmp.ne.s32.totalorder %s139, %s140
      %p152 = scmp.eq.s32.totalorder %s25, 1
      %p153 = por %p151, %p152
      %p155 = scmp.ne.s32.totalorder %s140, %s154
      %p156 = scmp.eq.s32.totalorder %s25, 0
      %p157 = por %p155, %p156
      %s159 = sadd.s32 %s158, 1
      %p162 = scmp.eq.s32.totalorder %s19, 1
      %p163 = scmp.ne.s32.totalorder %s158, %s160
      %p164 = scmp.eq.s32.totalorder %s19, 0
      %p165 = por %p163, %p164
      %p166 = scmp.ne.s32.totalorder %s158, %s160
      %p167 = scmp.eq.s32.totalorder %s24, 1
      %p168 = por %p166, %p167
      %p169 = scmp.ne.s32.totalorder %s160, %s161
      %p170 = scmp.eq.s32.totalorder %s24, 0
      %p171 = por %p169, %p170
      %p172 = scmp.ne.s32.totalorder %s160, %s161
      %p173 = scmp.eq.s32.totalorder %s25, 1
      %p174 = por %p172, %p173
      %p176 = scmp.ne.s32.totalorder %s161, %s175
      %p177 = scmp.eq.s32.totalorder %s25, 0
      %p178 = por %p176, %p177
      %s180 = sadd.s32 %s179, 1
      %p183 = scmp.eq.s32.totalorder %s19, 1
      %p184 = scmp.ne.s32.totalorder %s179, %s181
      %p185 = scmp.eq.s32.totalorder %s19, 0
      %p186 = por %p184, %p185
      %p187 = scmp.ne.s32.totalorder %s179, %s181
      %p188 = scmp.eq.s32.totalorder %s24, 1
      %p189 = por %p187, %p188
      %p190 = scmp.ne.s32.totalorder %s181, %s182
      %p191 = scmp.eq.s32.totalorder %s24, 0
      %p192 = por %p190, %p191
      %p193 = scmp.ne.s32.totalorder %s181, %s182
      %p194 = scmp.eq.s32.totalorder %s25, 1
      %p195 = por %p193, %p194
      %p197 = scmp.ne.s32.totalorder %s182, %s196
      %p198 = scmp.eq.s32.totalorder %s25, 0
      %p199 = por %p197, %p198
      %s200 = ssub.s32 %s19, %s26
      %p201 = scmp.eq.s32.totalorder %s200, 0
      %s203 = sadd.s32 %s202, 1
      %s204 = scalar_select %p201, %s202, %s203
      %p207 = pneg %p201
      %p208 = scmp.eq.s32.totalorder %s19, 1
      %p209 = por %p207, %p208
      %p210 = scmp.ne.s32.totalorder %s202, %s205
      %p211 = scmp.eq.s32.totalorder %s19, 0
      %p212 = por %p210, %p211
      %p213 = scmp.ne.s32.totalorder %s202, %s205
      %p214 = scmp.eq.s32.totalorder %s24, 1
      %p215 = por %p213, %p214
      %p216 = scmp.ne.s32.totalorder %s205, %s206
      %p217 = scmp.eq.s32.totalorder %s24, 0
      %p218 = por %p216, %p217
      %p219 = scmp.ne.s32.totalorder %s205, %s206
      %p220 = scmp.eq.s32.totalorder %s25, 1
      %p221 = por %p219, %p220
      %p223 = scmp.ne.s32.totalorder %s206, %s222
      %p224 = scmp.eq.s32.totalorder %s25, 0
      %p225 = por %p223, %p224
      %p226 = scmp.le.s32.totalorder 1, %s19
      %p227 = scmp.lt.s32.totalorder %s19, 3
      %p228 = pnand %p226, %p227
      %p229 = pneg %p228
      // Predicated region
      $region9: #{tpu_custom_call.1} parent=5 // pred_check
        _
      $region10: #{tpu_custom_call.1} parent=5 // pred_check_branch
        %231 = sbr.rel (%p228) target = $region12
      $region11: #{tpu_custom_call.1} parent=5 // pred_region
        %s232 = ssub.s32 %s19, 1
        // Predicated region
        $region13: #{tpu_custom_call.1} parent=11 // pred_check
          %p233 = pneg %p66
        $region14: #{tpu_custom_call.1} parent=11 // pred_check_branch
          %235 = sbr.rel (%p233) target = $region16
        $region15: #{tpu_custom_call.1} parent=11 // pred_region
          _
        $region16: #{tpu_custom_call.1} parent=11 // pred_fallthru
          _
        // Predicated region
        $region17: #{tpu_custom_call.1} parent=11 // pred_check
          %p236 = pneg %p87
        $region18: #{tpu_custom_call.1} parent=11 // pred_check_branch
          %238 = sbr.rel (%p236) target = $region20
        $region19: #{tpu_custom_call.1} parent=11 // pred_region
          _
        $region20: #{tpu_custom_call.1} parent=11 // pred_fallthru
          _
        // Predicated region
        $region21: #{tpu_custom_call.1} parent=11 // pred_check
          %p239 = pneg %p108
        $region22: #{tpu_custom_call.1} parent=11 // pred_check_branch
          %241 = sbr.rel (%p239) target = $region24
        $region23: #{tpu_custom_call.1} parent=11 // pred_region
          %s243 = ssub.s32 2048, 2048
          %244 = vsyncadd [#allocation3], %s243
          %s245 = sshll.u32 [#allocation2], 4
          %s246 = int_to_ptr.vmem [resolvable:$true] %s245
          %251 = dma.hbm_to_vmem [thread:$0]  %s3, 2048, %s246, [#allocation3], 128, 128, 8
        $region24: #{tpu_custom_call.1} parent=11 // pred_fallthru
          _
        // Predicated region
        $region25: #{tpu_custom_call.1} parent=11 // pred_check
          %p252 = pneg %p129
        $region26: #{tpu_custom_call.1} parent=11 // pred_check_branch
          %254 = sbr.rel (%p252) target = $region28
        $region27: #{tpu_custom_call.1} parent=11 // pred_region
          _
        $region28: #{tpu_custom_call.1} parent=11 // pred_fallthru
          _
        // Predicated region
        $region29: #{tpu_custom_call.1} parent=11 // pred_check
          %p255 = pneg %p150
        $region30: #{tpu_custom_call.1} parent=11 // pred_check_branch
          %257 = sbr.rel (%p255) target = $region32
        $region31: #{tpu_custom_call.1} parent=11 // pred_region
          %s259 = ssub.s32 2048, 2048
          %260 = vsyncadd [#allocation6], %s259
          %s261 = sshll.u32 [#allocation5], 4
          %s262 = int_to_ptr.vmem [resolvable:$true] %s261
          %267 = dma.hbm_to_vmem [thread:$0]  %s5, 2048, %s262, [#allocation6], 128, 128, 8
        $region32: #{tpu_custom_call.1} parent=11 // pred_fallthru
          _
        // Predicated region
        $region33: #{tpu_custom_call.1} parent=11 // pred_check
          %p268 = pneg %p171
        $region34: #{tpu_custom_call.1} parent=11 // pred_check_branch
          %270 = sbr.rel (%p268) target = $region36
        $region35: #{tpu_custom_call.1} parent=11 // pred_region
          _
        $region36: #{tpu_custom_call.1} parent=11 // pred_fallthru
          _
        // Predicated region
        $region37: #{tpu_custom_call.1} parent=11 // pred_check
          %p271 = pneg %p192
        $region38: #{tpu_custom_call.1} parent=11 // pred_check_branch
          %273 = sbr.rel (%p271) target = $region40
        $region39: #{tpu_custom_call.1} parent=11 // pred_region
          %s275 = ssub.s32 2048, 2048
          %276 = vsyncadd [#allocation6], %s275
          %s277 = sshll.u32 [#allocation7], 4
          %s278 = int_to_ptr.vmem [resolvable:$true] %s277
          %283 = dma.hbm_to_vmem [thread:$0]  %s7, 2048, %s278, [#allocation6], 128, 128, 8
        $region40: #{tpu_custom_call.1} parent=11 // pred_fallthru
          _
      $region12: #{tpu_custom_call.1} parent=5 // pred_fallthru
        _
      %p284 = scmp.lt.s32.totalorder %s19, 2
      // Predicated region
      $region41: #{tpu_custom_call.1} parent=5 // pred_check
        %p285 = pneg %p284
      $region42: #{tpu_custom_call.1} parent=5 // pred_check_branch
        %287 = sbr.rel (%p285) target = $region44
      $region43: #{tpu_custom_call.1} parent=5 // pred_region
        // Predicated region
        $region45: #{tpu_custom_call.1} parent=43 // pred_check
          %p288 = pneg %p39
        $region46: #{tpu_custom_call.1} parent=43 // pred_check_branch
          %290 = sbr.rel (%p288) target = $region48
        $region47: #{tpu_custom_call.1} parent=43 // pred_region
          %p291 = scmp.lt.s32.totalorder %s19, 1
          %s292 = scalar_select %p291, %s19, 1
          %s293 = smul.addr %s292, 8
          %s294 = scalar_lea.vmem %s0, %s293
        $region48: #{tpu_custom_call.1} parent=43 // pred_fallthru
          _
      $region44: #{tpu_custom_call.1} parent=5 // pred_fallthru
        _
      %p295 = scmp.le.s32.totalorder 1, %s19
      %p296 = scmp.lt.s32.totalorder %s19, 3
      %p297 = pnand %p295, %p296
      %p298 = pneg %p297
      // Predicated region
      $region49: #{tpu_custom_call.1} parent=5 // pred_check
        _
      $region50: #{tpu_custom_call.1} parent=5 // pred_check_branch
        %300 = sbr.rel (%p297) target = $region52
      $region51: #{tpu_custom_call.1} parent=5 // pred_region
        %s301 = ssub.s32 %s19, 1
        // Predicated region
        $region53: #{tpu_custom_call.1} parent=51 // pred_check
          %p302 = pneg %p108
        $region54: #{tpu_custom_call.1} parent=51 // pred_check_branch
          %304 = sbr.rel (%p302) target = $region56
        $region55: #{tpu_custom_call.1} parent=51 // pred_region
          %305 = dma.done [#allocation3], 2048
        $region56: #{tpu_custom_call.1} parent=51 // pred_fallthru
          _
        // Predicated region
        $region57: #{tpu_custom_call.1} parent=51 // pred_check
          %p306 = pneg %p150
        $region58: #{tpu_custom_call.1} parent=51 // pred_check_branch
          %308 = sbr.rel (%p306) target = $region60
        $region59: #{tpu_custom_call.1} parent=51 // pred_region
          %309 = dma.done [#allocation6], 2048
        $region60: #{tpu_custom_call.1} parent=51 // pred_fallthru
          _
        // Predicated region
        $region61: #{tpu_custom_call.1} parent=51 // pred_check
          %p310 = pneg %p192
        $region62: #{tpu_custom_call.1} parent=51 // pred_check_branch
          %312 = sbr.rel (%p310) target = $region64
        $region63: #{tpu_custom_call.1} parent=51 // pred_region
          %313 = dma.done [#allocation6], 2048
        $region64: #{tpu_custom_call.1} parent=51 // pred_fallthru
          _
        %p314 = scmp.lt.s32.totalorder %s24, 1
        %s315 = scalar_select %p314, %s24, 1
        %s316 = smul.addr %s315, 8
        %s317 = scalar_lea.vmem %s0, %s316
        %p318 = pneg %p45
        %p319 = pneg %p42
        %p320 = pneg %p66
        %p321 = pneg %p63
        %p322 = pneg %p87
        %p323 = pneg %p84
        %p324 = pneg %p108
        %p325 = pneg %p105
        %p326 = pneg %p129
        %p327 = pneg %p126
        %p328 = pneg %p150
        %p329 = pneg %p147
        %p330 = pneg %p171
        %p331 = pneg %p168
        %p332 = pneg %p192
        %p333 = pneg %p189
        %p334 = pneg %p218
        %p335 = pneg %p215
        %s336 = sand.u32 %s205, 1
        %s337 = scalar_lea.sflag [#allocation4], %s336
        %s338 = sand.u32 %s205, 1
        %s339 = smul.addr %s338, 8
        %s340 = scalar_lea.vmem [#allocation8], %s339
        %p341 = scmp.lt.s32.totalorder %s24, 1
        %s342 = scalar_select %p341, %s24, 1
        %s343 = smul.addr %s342, 8
        %s344 = scalar_lea.vmem %s0, %s343
        %v345 = vld [vmem:[%s344] sm:$0xff]
        %v346 = vld [vmem:[%s1] sm:$0xff]
        %348 = vset.pattern.permute.xlu0 0
        %349 = vperm.xlu0 %348, %v345
        %v350 = vpop.permute.xlu0 %349
        %v352 = vlaneseq
        %v353 = vshrl.u32 %v352, 7
        %v354 = vsub.s32 0, %v353
        %v355 = vrot.slane %v346, %v354
        %v356 = vmul.f32 %v350, %v355
        %357 = vset.pattern.permute.xlu0 1
        %358 = vperm.xlu0 %357, %v345
        %v359 = vpop.permute.xlu0 %358
        %v361 = vlaneseq
        %v362 = vshrl.u32 %v361, 7
        %v363 = vsub.s32 1, %v362
        %v364 = vrot.slane %v346, %v363
        %v365 = vmul.f32 %v359, %v364
        %v366 = vadd.f32 %v356, %v365
        %367 = vset.pattern.permute.xlu0 2
        %368 = vperm.xlu0 %367, %v345
        %v369 = vpop.permute.xlu0 %368
        %v371 = vlaneseq
        %v372 = vshrl.u32 %v371, 7
        %v373 = vsub.s32 2, %v372
        %v374 = vrot.slane %v346, %v373
        %v375 = vmul.f32 %v369, %v374
        %v376 = vadd.f32 %v366, %v375
        %377 = vset.pattern.permute.xlu0 3
        %378 = vperm.xlu0 %377, %v345
        %v379 = vpop.permute.xlu0 %378
        %v381 = vlaneseq
        %v382 = vshrl.u32 %v381, 7
        %v383 = vsub.s32 3, %v382
        %v384 = vrot.slane %v346, %v383
        %v385 = vmul.f32 %v379, %v384
        %v386 = vadd.f32 %v376, %v385
        %387 = vset.pattern.permute.xlu0 4
        %388 = vperm.xlu0 %387, %v345
        %v389 = vpop.permute.xlu0 %388
        %v391 = vlaneseq
        %v392 = vshrl.u32 %v391, 7
        %v393 = vsub.s32 4, %v392
        %v394 = vrot.slane %v346, %v393
        %v395 = vmul.f32 %v389, %v394
        %v396 = vadd.f32 %v386, %v395
        %397 = vset.pattern.permute.xlu0 5
        %398 = vperm.xlu0 %397, %v345
        %v399 = vpop.permute.xlu0 %398
        %v401 = vlaneseq
        %v402 = vshrl.u32 %v401, 7
        %v403 = vsub.s32 5, %v402
        %v404 = vrot.slane %v346, %v403
        %v405 = vmul.f32 %v399, %v404
        %v406 = vadd.f32 %v396, %v405
        %407 = vset.pattern.permute.xlu0 6
        %408 = vperm.xlu0 %407, %v345
        %v409 = vpop.permute.xlu0 %408
        %v411 = vlaneseq
        %v412 = vshrl.u32 %v411, 7
        %v413 = vsub.s32 6, %v412
        %v414 = vrot.slane %v346, %v413
        %v415 = vmul.f32 %v409, %v414
        %v416 = vadd.f32 %v406, %v415
        %417 = vset.pattern.permute.xlu0 7
        %418 = vperm.xlu0 %417, %v345
        %v419 = vpop.permute.xlu0 %418
        %v421 = vlaneseq
        %v422 = vshrl.u32 %v421, 7
        %v423 = vsub.s32 7, %v422
        %v424 = vrot.slane %v346, %v423
        %v425 = vmul.f32 %v419, %v424
        %v426 = vadd.f32 %v416, %v425
        %v427 = vld [vmem:[%s2] sm:$0x1]
        %v429 = vlaneseq
        %v430 = vshrl.u32 %v429, 7
        %v431 = vsub.s32 0, %v430
        %v432 = vrot.slane %v427, %v431
        %v434 = vadd.f32 %v426, %v432
        %v435 = vand.u32 2147483647, %v434
        %vm436 = vcmp.le.f32.partialorder %v435, 0.7853982
        %vm437 = vcmp.lt.s32.totalorder %v434, 0
        %v438 = vand.u32 %v434, 2139095040
        %v439 = vshrl.u32 %v438, 23
        %v440 = vsub.s32 %v439, 127
        %v441 = vand.u32 2147483647, %v434
        %v442 = vand.u32 %v441, 8388607
        %v443 = vor.u32 %v442, 8388608
        %v444 = vsub.s32 0, %v443
        %v445 = vadd.s32 %v440, 1
        %vm446 = vcmp.gt.s32.totalorder %v445, 0
        %v447 = vsel %vm446, %v445, 0
        %v448 = vshrl.u32 %v447, 5
        %v449 = vand.u32 %v447, 31
        %v450 = vsub.s32 32, %v449
        %v451 = vshrl.u32 683565275, %v450
        %v452 = vshll.u32 683565275, %v449
        %v453 = vshrl.u32 2475754826, %v450
        %v454 = vor.u32 %v452, %v453
        %v455 = vshll.u32 2475754826, %v449
        %v456 = vshrl.u32 2131351028, %v450
        %v457 = vor.u32 %v455, %v456
        %v458 = vshll.u32 2131351028, %v449
        %v459 = vshrl.u32 2102212464, %v450
        %v460 = vor.u32 %v458, %v459
        %v461 = vshll.u32 2102212464, %v449
        %v462 = vshrl.u32 920167782, %v450
        %v463 = vor.u32 %v461, %v462
        %v464 = vshll.u32 920167782, %v449
        %v465 = vshrl.u32 1326507024, %v450
        %v466 = vor.u32 %v464, %v465
        %vm467 = vcmp.lt.s32.totalorder %v448, 1
        %vm468 = vcmp.lt.s32.totalorder %v448, 2
        %vm469 = vcmp.lt.s32.totalorder %v448, 3
        %vm470 = vcmp.lt.s32.totalorder %v448, 4
        %v471 = vsel %vm467, %v451, %v454
        %v472 = vsel %vm470, %v460, 2102212464
        %v473 = vsel %vm469, %v457, %v472
        %v474 = vsel %vm468, %v471, %v473
        %v475 = vsel %vm467, %v454, %v457
        %v476 = vsel %vm470, %v463, 920167782
        %v477 = vsel %vm469, %v460, %v476
        %v478 = vsel %vm468, %v475, %v477
        %v479 = vsel %vm467, %v457, %v460
        %v480 = vsel %vm470, %v466, 1326507024
        %v481 = vsel %vm469, %v463, %v480
        %v482 = vsel %vm468, %v479, %v481
        %v483 = vshll.u32 %v443, 8
        %v484 = vmul.u32.u64.compose %v483, %v482
        %v485 = vextract.low.u32 %v484
        %v486 = vextract.high.u32 %v484
        %v487 = vmul.u32.u64.compose %v483, %v478
        %v488 = vextract.low.u32 %v487
        %v489 = vextract.high.u32 %v487
        %v490 = vmul.u32 %v483, %v474
        %v491 = vadd.s32 %v486, %v488
        %vm492 = vc.u32 %v486, %v488
        %v493 = vadd.s32 %v489, 1
        %v494 = vsel %vm492, %v493, %v489
        %v495 = vadd.s32 %v490, %v494
        %v496 = vadd.s32 %v495, 536870912
        %v497 = vshrl.u32 %v496, 30
        %v498 = vshll.u32 %v497, 30
        %v499 = vsub.s32 %v495, %v498
        %vm500 = vcmp.lt.s32.totalorder %v499, 0
        %v501 = vsub.s32 0, %v499
        %v502 = vsel %vm500, %v501, %v499
        %v503 = vclz %v502
        %v504 = vsub.s32 %v503, 2
        %vm505 = vcmp.gt.s32.totalorder 0, %v504
        %v506 = vsel %vm505, 0, %v504
        %v507 = vsub.s32 32, %v506
        %v508 = vshll.u32 %v499, %v506
        %v509 = vshrl.u32 %v491, %v507
        %v510 = vor.u32 %v508, %v509
        %v511 = vsub.s32 4294967266, %v506
        %v512 = vadd.s32 %v511, 127
        %v513 = vshll.u32 %v512, 23
        %v514 = vor.u32 4788187, %v513
        %v515 = vand.u32 2147483647, %v514
        %v517 = vcvt.s32.f32 %v510
        %v518 = vmul.f32 %v517, %v515
        %v519 = vxor.u32 %v518, 2147483648
        %v520 = vsel %vm437, %v519, %v518
        %v521 = vsub.s32 4, %v497
        %v522 = vsel %vm437, %v521, %v497
        %v523 = vsel %vm436, %v434, %v520
        %v524 = vsel %vm436, 0, %v522
        %v525 = vcosq.f32.pop %v523
        %v526 = vsinq.f32.pop %v523
        %vm527 = vweird.f32 %v434
        %v528 = vadd.s32 %v524, 3
        %v529 = vand.u32 %v528, 3
        %vm530 = vcmp.lt.s32.totalorder %v529, 2
        %vm531 = vcmp.eq.s32.totalorder %v529, 0
        %v532 = vxor.u32 %v526, 2147483648
        %v533 = vsel %vm531, %v525, %v532
        %vm534 = vcmp.eq.s32.totalorder %v529, 2
        %v535 = vxor.u32 %v525, 2147483648
        %v536 = vsel %vm534, %v535, %v526
        %v537 = vsel %vm530, %v533, %v536
        %v538 = vsel %vm527, nan, %v537
        %v539 = vld [vmem:[#allocation2] sm:$0xff]
        %v540 = vld [vmem:[#allocation2 + $0x8] sm:$0xff]
        %v541 = vld [vmem:[#allocation2 + $0x10] sm:$0xff]
        %v542 = vld [vmem:[#allocation2 + $0x18] sm:$0xff]
        %v543 = vld [vmem:[#allocation2 + $0x20] sm:$0xff]
        %v544 = vld [vmem:[#allocation2 + $0x28] sm:$0xff]
        %v545 = vld [vmem:[#allocation2 + $0x30] sm:$0xff]
        %v546 = vld [vmem:[#allocation2 + $0x38] sm:$0xff]
        %v547 = vld [vmem:[#allocation2 + $0x40] sm:$0xff]
        %v548 = vld [vmem:[#allocation2 + $0x48] sm:$0xff]
        %v549 = vld [vmem:[#allocation2 + $0x50] sm:$0xff]
        %v550 = vld [vmem:[#allocation2 + $0x58] sm:$0xff]
        %v551 = vld [vmem:[#allocation2 + $0x60] sm:$0xff]
        %v552 = vld [vmem:[#allocation2 + $0x68] sm:$0xff]
        %v553 = vld [vmem:[#allocation2 + $0x70] sm:$0xff]
        %v554 = vld [vmem:[#allocation2 + $0x78] sm:$0xff]
        %v555 = vld [vmem:[%s4] sm:$0x1]
        %v557 = vlaneseq
        %v558 = vshrl.u32 %v557, 7
        %v559 = vsub.s32 0, %v558
        %v560 = vrot.slane %v555, %v559
        %562 = vmatprep.subr.mxu0 0.0
        %563 = vmatpush1.msra.mxu0 %v539
        %564 = vmatprep.subr.mxu0 0.0
        %565 = vmatpush1.msra.mxu0 %v540
        %566 = vmatprep.subr.mxu0 0.0
        %567 = vmatpush1.msra.mxu0 %v541
        %568 = vmatprep.subr.mxu0 0.0
        %569 = vmatpush1.msra.mxu0 %v542
        %570 = vmatprep.subr.mxu0 0.0
        %571 = vmatpush1.msra.mxu0 %v543
        %572 = vmatprep.subr.mxu0 0.0
        %573 = vmatpush1.msra.mxu0 %v544
        %574 = vmatprep.subr.mxu0 0.0
        %575 = vmatpush1.msra.mxu0 %v545
        %576 = vmatprep.subr.mxu0 0.0
        %577 = vmatpush1.msra.mxu0 %v546
        %578 = vmatprep.subr.mxu0 0.0
        %579 = vmatpush1.msra.mxu0 %v547
        %580 = vmatprep.subr.mxu0 0.0
        %581 = vmatpush1.msra.mxu0 %v548
        %582 = vmatprep.subr.mxu0 0.0
        %583 = vmatpush1.msra.mxu0 %v549
        %584 = vmatprep.subr.mxu0 0.0
        %585 = vmatpush1.msra.mxu0 %v550
        %586 = vmatprep.subr.mxu0 0.0
        %587 = vmatpush1.msra.mxu0 %v551
        %588 = vmatprep.subr.mxu0 0.0
        %589 = vmatpush1.msra.mxu0 %v552
        %590 = vmatprep.subr.mxu0 0.0
        %591 = vmatpush1.msra.mxu0 %v553
        %592 = vmatprep.subr.mxu0 0.0
        %593 = vmatpush1.msra.mxu0 %v554
        %594 = vmatprep.subr.mxu0 0.0
        %595 = vmatpush1.msra.mxu0 0.0
        %596 = vmatprep.subr.mxu0 0.0
        %597 = vmatpush1.msra.mxu0 0.0
        %598 = vmatprep.subr.mxu0 0.0
        %599 = vmatpush1.msra.mxu0 0.0
        %600 = vmatprep.subr.mxu0 0.0
        %601 = vmatpush1.msra.mxu0 0.0
        %602 = vmatprep.subr.mxu0 0.0
        %603 = vmatpush1.msra.mxu0 0.0
        %604 = vmatprep.subr.mxu0 0.0
        %605 = vmatpush1.msra.mxu0 0.0
        %606 = vmatprep.subr.mxu0 0.0
        %607 = vmatpush1.msra.mxu0 0.0
        %608 = vmatprep.subr.mxu0 0.0
        %609 = vmatpush1.msra.mxu0 0.0
        %610 = vmatprep.subr.mxu0 0.0
        %611 = vmatpush1.msra.mxu0 0.0
        %612 = vmatprep.subr.mxu0 0.0
        %613 = vmatpush1.msra.mxu0 0.0
        %614 = vmatprep.subr.mxu0 0.0
        %615 = vmatpush1.msra.mxu0 0.0
        %616 = vmatprep.subr.mxu0 0.0
        %617 = vmatpush1.msra.mxu0 0.0
        %618 = vmatprep.subr.mxu0 0.0
        %619 = vmatpush1.msra.mxu0 0.0
        %620 = vmatprep.subr.mxu0 0.0
        %621 = vmatpush1.msra.mxu0 0.0
        %622 = vmatprep.subr.mxu0 0.0
        %623 = vmatpush1.msra.mxu0 0.0
        %624 = vmatprep.subr.mxu0 0.0
        %625 = vmatpush1.msra.mxu0 0.0
        %626 = vmatprep.mubr.f32.mxu0 0.0
        %627 = vmatmul.mubr.f32.gmra.mrb[0].mxu0 %v538
        %v628 = vpop.f32.mrb[0].mxu0
        %v629 = vadd.f32 %v560, %v628
        %v630 = vpop.f32.mrb[0].mxu0
        %631 = vdwg.mxu0
        %v632 = vand.u32 2147483647, %v629
        %vm633 = vcmp.le.f32.partialorder %v632, 0.7853982
        %vm634 = vcmp.lt.s32.totalorder %v629, 0
        %v635 = vand.u32 %v629, 2139095040
        %v636 = vshrl.u32 %v635, 23
        %v637 = vsub.s32 %v636, 127
        %v638 = vand.u32 2147483647, %v629
        %v639 = vand.u32 %v638, 8388607
        %v640 = vor.u32 %v639, 8388608
        %v641 = vsub.s32 0, %v640
        %v642 = vadd.s32 %v637, 1
        %vm643 = vcmp.gt.s32.totalorder %v642, 0
        %v644 = vsel %vm643, %v642, 0
        %v645 = vshrl.u32 %v644, 5
        %v646 = vand.u32 %v644, 31
        %v647 = vsub.s32 32, %v646
        %v648 = vshrl.u32 683565275, %v647
        %v649 = vshll.u32 683565275, %v646
        %v650 = vshrl.u32 2475754826, %v647
        %v651 = vor.u32 %v649, %v650
        %v652 = vshll.u32 2475754826, %v646
        %v653 = vshrl.u32 2131351028, %v647
        %v654 = vor.u32 %v652, %v653
        %v655 = vshll.u32 2131351028, %v646
        %v656 = vshrl.u32 2102212464, %v647
        %v657 = vor.u32 %v655, %v656
        %v658 = vshll.u32 2102212464, %v646
        %v659 = vshrl.u32 920167782, %v647
        %v660 = vor.u32 %v658, %v659
        %v661 = vshll.u32 920167782, %v646
        %v662 = vshrl.u32 1326507024, %v647
        %v663 = vor.u32 %v661, %v662
        %vm664 = vcmp.lt.s32.totalorder %v645, 1
        %vm665 = vcmp.lt.s32.totalorder %v645, 2
        %vm666 = vcmp.lt.s32.totalorder %v645, 3
        %vm667 = vcmp.lt.s32.totalorder %v645, 4
        %v668 = vsel %vm664, %v648, %v651
        %v669 = vsel %vm667, %v657, 2102212464
        %v670 = vsel %vm666, %v654, %v669
        %v671 = vsel %vm665, %v668, %v670
        %v672 = vsel %vm664, %v651, %v654
        %v673 = vsel %vm667, %v660, 920167782
        %v674 = vsel %vm666, %v657, %v673
        %v675 = vsel %vm665, %v672, %v674
        %v676 = vsel %vm664, %v654, %v657
        %v677 = vsel %vm667, %v663, 1326507024
        %v678 = vsel %vm666, %v660, %v677
        %v679 = vsel %vm665, %v676, %v678
        %v680 = vshll.u32 %v640, 8
        %v681 = vmul.u32.u64.compose %v680, %v679
        %v682 = vextract.low.u32 %v681
        %v683 = vextract.high.u32 %v681
        %v684 = vmul.u32.u64.compose %v680, %v675
        %v685 = vextract.low.u32 %v684
        %v686 = vextract.high.u32 %v684
        %v687 = vmul.u32 %v680, %v671
        %v688 = vadd.s32 %v683, %v685
        %vm689 = vc.u32 %v683, %v685
        %v690 = vadd.s32 %v686, 1
        %v691 = vsel %vm689, %v690, %v686
        %v692 = vadd.s32 %v687, %v691
        %v693 = vadd.s32 %v692, 536870912
        %v694 = vshrl.u32 %v693, 30
        %v695 = vshll.u32 %v694, 30
        %v696 = vsub.s32 %v692, %v695
        %vm697 = vcmp.lt.s32.totalorder %v696, 0
        %v698 = vsub.s32 0, %v696
        %v699 = vsel %vm697, %v698, %v696
        %v700 = vclz %v699
        %v701 = vsub.s32 %v700, 2
        %vm702 = vcmp.gt.s32.totalorder 0, %v701
        %v703 = vsel %vm702, 0, %v701
        %v704 = vsub.s32 32, %v703
        %v705 = vshll.u32 %v696, %v703
        %v706 = vshrl.u32 %v688, %v704
        %v707 = vor.u32 %v705, %v706
        %v708 = vsub.s32 4294967266, %v703
        %v709 = vadd.s32 %v708, 127
        %v710 = vshll.u32 %v709, 23
        %v711 = vor.u32 4788187, %v710
        %v712 = vand.u32 2147483647, %v711
        %v714 = vcvt.s32.f32 %v707
        %v715 = vmul.f32 %v714, %v712
        %v716 = vxor.u32 %v715, 2147483648
        %v717 = vsel %vm634, %v716, %v715
        %v718 = vsub.s32 4, %v694
        %v719 = vsel %vm634, %v718, %v694
        %v720 = vsel %vm633, %v629, %v717
        %v721 = vsel %vm633, 0, %v719
        %v722 = vcosq.f32.pop %v720
        %v723 = vsinq.f32.pop %v720
        %vm724 = vweird.f32 %v629
        %v725 = vadd.s32 %v721, 3
        %v726 = vand.u32 %v725, 3
        %vm727 = vcmp.lt.s32.totalorder %v726, 2
        %vm728 = vcmp.eq.s32.totalorder %v726, 0
        %v729 = vxor.u32 %v723, 2147483648
        %v730 = vsel %vm728, %v722, %v729
        %vm731 = vcmp.eq.s32.totalorder %v726, 2
        %v732 = vxor.u32 %v722, 2147483648
        %v733 = vsel %vm731, %v732, %v723
        %v734 = vsel %vm727, %v730, %v733
        %v735 = vsel %vm724, nan, %v734
        %v736 = vld [vmem:[#allocation5] sm:$0xff]
        %v737 = vld [vmem:[#allocation5 + $0x8] sm:$0xff]
        %v738 = vld [vmem:[#allocation5 + $0x10] sm:$0xff]
        %v739 = vld [vmem:[#allocation5 + $0x18] sm:$0xff]
        %v740 = vld [vmem:[#allocation5 + $0x20] sm:$0xff]
        %v741 = vld [vmem:[#allocation5 + $0x28] sm:$0xff]
        %v742 = vld [vmem:[#allocation5 + $0x30] sm:$0xff]
        %v743 = vld [vmem:[#allocation5 + $0x38] sm:$0xff]
        %v744 = vld [vmem:[#allocation5 + $0x40] sm:$0xff]
        %v745 = vld [vmem:[#allocation5 + $0x48] sm:$0xff]
        %v746 = vld [vmem:[#allocation5 + $0x50] sm:$0xff]
        %v747 = vld [vmem:[#allocation5 + $0x58] sm:$0xff]
        %v748 = vld [vmem:[#allocation5 + $0x60] sm:$0xff]
        %v749 = vld [vmem:[#allocation5 + $0x68] sm:$0xff]
        %v750 = vld [vmem:[#allocation5 + $0x70] sm:$0xff]
        %v751 = vld [vmem:[#allocation5 + $0x78] sm:$0xff]
        %v752 = vld [vmem:[%s6] sm:$0x1]
        %v754 = vlaneseq
        %v755 = vshrl.u32 %v754, 7
        %v756 = vsub.s32 0, %v755
        %v757 = vrot.slane %v752, %v756
        %759 = vmatprep.subr.mxu0 0.0
        %760 = vmatpush1.msra.mxu0 %v736
        %761 = vmatprep.subr.mxu0 0.0
        %762 = vmatpush1.msra.mxu0 %v737
        %763 = vmatprep.subr.mxu0 0.0
        %764 = vmatpush1.msra.mxu0 %v738
        %765 = vmatprep.subr.mxu0 0.0
        %766 = vmatpush1.msra.mxu0 %v739
        %767 = vmatprep.subr.mxu0 0.0
        %768 = vmatpush1.msra.mxu0 %v740
        %769 = vmatprep.subr.mxu0 0.0
        %770 = vmatpush1.msra.mxu0 %v741
        %771 = vmatprep.subr.mxu0 0.0
        %772 = vmatpush1.msra.mxu0 %v742
        %773 = vmatprep.subr.mxu0 0.0
        %774 = vmatpush1.msra.mxu0 %v743
        %775 = vmatprep.subr.mxu0 0.0
        %776 = vmatpush1.msra.mxu0 %v744
        %777 = vmatprep.subr.mxu0 0.0
        %778 = vmatpush1.msra.mxu0 %v745
        %779 = vmatprep.subr.mxu0 0.0
        %780 = vmatpush1.msra.mxu0 %v746
        %781 = vmatprep.subr.mxu0 0.0
        %782 = vmatpush1.msra.mxu0 %v747
        %783 = vmatprep.subr.mxu0 0.0
        %784 = vmatpush1.msra.mxu0 %v748
        %785 = vmatprep.subr.mxu0 0.0
        %786 = vmatpush1.msra.mxu0 %v749
        %787 = vmatprep.subr.mxu0 0.0
        %788 = vmatpush1.msra.mxu0 %v750
        %789 = vmatprep.subr.mxu0 0.0
        %790 = vmatpush1.msra.mxu0 %v751
        %791 = vmatprep.subr.mxu0 0.0
        %792 = vmatpush1.msra.mxu0 0.0
        %793 = vmatprep.subr.mxu0 0.0
        %794 = vmatpush1.msra.mxu0 0.0
        %795 = vmatprep.subr.mxu0 0.0
        %796 = vmatpush1.msra.mxu0 0.0
        %797 = vmatprep.subr.mxu0 0.0
        %798 = vmatpush1.msra.mxu0 0.0
        %799 = vmatprep.subr.mxu0 0.0
        %800 = vmatpush1.msra.mxu0 0.0
        %801 = vmatprep.subr.mxu0 0.0
        %802 = vmatpush1.msra.mxu0 0.0
        %803 = vmatprep.subr.mxu0 0.0
        %804 = vmatpush1.msra.mxu0 0.0
        %805 = vmatprep.subr.mxu0 0.0
        %806 = vmatpush1.msra.mxu0 0.0
        %807 = vmatprep.subr.mxu0 0.0
        %808 = vmatpush1.msra.mxu0 0.0
        %809 = vmatprep.subr.mxu0 0.0
        %810 = vmatpush1.msra.mxu0 0.0
        %811 = vmatprep.subr.mxu0 0.0
        %812 = vmatpush1.msra.mxu0 0.0
        %813 = vmatprep.subr.mxu0 0.0
        %814 = vmatpush1.msra.mxu0 0.0
        %815 = vmatprep.subr.mxu0 0.0
        %816 = vmatpush1.msra.mxu0 0.0
        %817 = vmatprep.subr.mxu0 0.0
        %818 = vmatpush1.msra.mxu0 0.0
        %819 = vmatprep.subr.mxu0 0.0
        %820 = vmatpush1.msra.mxu0 0.0
        %821 = vmatprep.subr.mxu0 0.0
        %822 = vmatpush1.msra.mxu0 0.0
        %823 = vmatprep.mubr.f32.mxu0 0.0
        %824 = vmatmul.mubr.f32.gmra.mrb[0].mxu0 %v735
        %v825 = vpop.f32.mrb[0].mxu0
        %v826 = vadd.f32 %v757, %v825
        %v827 = vpop.f32.mrb[0].mxu0
        %828 = vdwg.mxu0
        %v829 = vand.u32 2147483647, %v826
        %vm830 = vcmp.le.f32.partialorder %v829, 0.7853982
        %vm831 = vcmp.lt.s32.totalorder %v826, 0
        %v832 = vand.u32 %v826, 2139095040
        %v833 = vshrl.u32 %v832, 23
        %v834 = vsub.s32 %v833, 127
        %v835 = vand.u32 2147483647, %v826
        %v836 = vand.u32 %v835, 8388607
        %v837 = vor.u32 %v836, 8388608
        %v838 = vsub.s32 0, %v837
        %v839 = vadd.s32 %v834, 1
        %vm840 = vcmp.gt.s32.totalorder %v839, 0
        %v841 = vsel %vm840, %v839, 0
        %v842 = vshrl.u32 %v841, 5
        %v843 = vand.u32 %v841, 31
        %v844 = vsub.s32 32, %v843
        %v845 = vshrl.u32 683565275, %v844
        %v846 = vshll.u32 683565275, %v843
        %v847 = vshrl.u32 2475754826, %v844
        %v848 = vor.u32 %v846, %v847
        %v849 = vshll.u32 2475754826, %v843
        %v850 = vshrl.u32 2131351028, %v844
        %v851 = vor.u32 %v849, %v850
        %v852 = vshll.u32 2131351028, %v843
        %v853 = vshrl.u32 2102212464, %v844
        %v854 = vor.u32 %v852, %v853
        %v855 = vshll.u32 2102212464, %v843
        %v856 = vshrl.u32 920167782, %v844
        %v857 = vor.u32 %v855, %v856
        %v858 = vshll.u32 920167782, %v843
        %v859 = vshrl.u32 1326507024, %v844
        %v860 = vor.u32 %v858, %v859
        %vm861 = vcmp.lt.s32.totalorder %v842, 1
        %vm862 = vcmp.lt.s32.totalorder %v842, 2
        %vm863 = vcmp.lt.s32.totalorder %v842, 3
        %vm864 = vcmp.lt.s32.totalorder %v842, 4
        %v865 = vsel %vm861, %v845, %v848
        %v866 = vsel %vm864, %v854, 2102212464
        %v867 = vsel %vm863, %v851, %v866
        %v868 = vsel %vm862, %v865, %v867
        %v869 = vsel %vm861, %v848, %v851
        %v870 = vsel %vm864, %v857, 920167782
        %v871 = vsel %vm863, %v854, %v870
        %v872 = vsel %vm862, %v869, %v871
        %v873 = vsel %vm861, %v851, %v854
        %v874 = vsel %vm864, %v860, 1326507024
        %v875 = vsel %vm863, %v857, %v874
        %v876 = vsel %vm862, %v873, %v875
        %v877 = vshll.u32 %v837, 8
        %v878 = vmul.u32.u64.compose %v877, %v876
        %v879 = vextract.low.u32 %v878
        %v880 = vextract.high.u32 %v878
        %v881 = vmul.u32.u64.compose %v877, %v872
        %v882 = vextract.low.u32 %v881
        %v883 = vextract.high.u32 %v881
        %v884 = vmul.u32 %v877, %v868
        %v885 = vadd.s32 %v880, %v882
        %vm886 = vc.u32 %v880, %v882
        %v887 = vadd.s32 %v883, 1
        %v888 = vsel %vm886, %v887, %v883
        %v889 = vadd.s32 %v884, %v888
        %v890 = vadd.s32 %v889, 536870912
        %v891 = vshrl.u32 %v890, 30
        %v892 = vshll.u32 %v891, 30
        %v893 = vsub.s32 %v889, %v892
        %vm894 = vcmp.lt.s32.totalorder %v893, 0
        %v895 = vsub.s32 0, %v893
        %v896 = vsel %vm894, %v895, %v893
        %v897 = vclz %v896
        %v898 = vsub.s32 %v897, 2
        %vm899 = vcmp.gt.s32.totalorder 0, %v898
        %v900 = vsel %vm899, 0, %v898
        %v901 = vsub.s32 32, %v900
        %v902 = vshll.u32 %v893, %v900
        %v903 = vshrl.u32 %v885, %v901
        %v904 = vor.u32 %v902, %v903
        %v905 = vsub.s32 4294967266, %v900
        %v906 = vadd.s32 %v905, 127
        %v907 = vshll.u32 %v906, 23
        %v908 = vor.u32 4788187, %v907
        %v909 = vand.u32 2147483647, %v908
        %v911 = vcvt.s32.f32 %v904
        %v912 = vmul.f32 %v911, %v909
        %v913 = vxor.u32 %v912, 2147483648
        %v914 = vsel %vm831, %v913, %v912
        %v915 = vsub.s32 4, %v891
        %v916 = vsel %vm831, %v915, %v891
        %v917 = vsel %vm830, %v826, %v914
        %v918 = vsel %vm830, 0, %v916
        %v919 = vcosq.f32.pop %v917
        %v920 = vsinq.f32.pop %v917
        %vm921 = vweird.f32 %v826
        %v922 = vadd.s32 %v918, 3
        %v923 = vand.u32 %v922, 3
        %vm924 = vcmp.lt.s32.totalorder %v923, 2
        %vm925 = vcmp.eq.s32.totalorder %v923, 0
        %v926 = vxor.u32 %v920, 2147483648
        %v927 = vsel %vm925, %v919, %v926
        %vm928 = vcmp.eq.s32.totalorder %v923, 2
        %v929 = vxor.u32 %v919, 2147483648
        %v930 = vsel %vm928, %v929, %v920
        %v931 = vsel %vm924, %v927, %v930
        %v932 = vsel %vm921, nan, %v931
        %v933 = vld [vmem:[#allocation7] sm:$0xff]
        %v934 = vld [vmem:[#allocation7 + $0x8] sm:$0xff]
        %v935 = vld [vmem:[#allocation7 + $0x10] sm:$0xff]
        %v936 = vld [vmem:[#allocation7 + $0x18] sm:$0xff]
        %v937 = vld [vmem:[#allocation7 + $0x20] sm:$0xff]
        %v938 = vld [vmem:[#allocation7 + $0x28] sm:$0xff]
        %v939 = vld [vmem:[#allocation7 + $0x30] sm:$0xff]
        %v940 = vld [vmem:[#allocation7 + $0x38] sm:$0xff]
        %v941 = vld [vmem:[#allocation7 + $0x40] sm:$0xff]
        %v942 = vld [vmem:[#allocation7 + $0x48] sm:$0xff]
        %v943 = vld [vmem:[#allocation7 + $0x50] sm:$0xff]
        %v944 = vld [vmem:[#allocation7 + $0x58] sm:$0xff]
        %v945 = vld [vmem:[#allocation7 + $0x60] sm:$0xff]
        %v946 = vld [vmem:[#allocation7 + $0x68] sm:$0xff]
        %v947 = vld [vmem:[#allocation7 + $0x70] sm:$0xff]
        %v948 = vld [vmem:[#allocation7 + $0x78] sm:$0xff]
        %949 = vmatprep.subr.mxu0 0.0
        %950 = vmatpush1.msra.mxu0 %v933
        %951 = vmatprep.subr.mxu0 0.0
        %952 = vmatpush1.msra.mxu0 %v934
        %953 = vmatprep.subr.mxu0 0.0
        %954 = vmatpush1.msra.mxu0 %v935
        %955 = vmatprep.subr.mxu0 0.0
        %956 = vmatpush1.msra.mxu0 %v936
        %957 = vmatprep.subr.mxu0 0.0
        %958 = vmatpush1.msra.mxu0 %v937
        %959 = vmatprep.subr.mxu0 0.0
        %960 = vmatpush1.msra.mxu0 %v938
        %961 = vmatprep.subr.mxu0 0.0
        %962 = vmatpush1.msra.mxu0 %v939
        %963 = vmatprep.subr.mxu0 0.0
        %964 = vmatpush1.msra.mxu0 %v940
        %965 = vmatprep.subr.mxu0 0.0
        %966 = vmatpush1.msra.mxu0 %v941
        %967 = vmatprep.subr.mxu0 0.0
        %968 = vmatpush1.msra.mxu0 %v942
        %969 = vmatprep.subr.mxu0 0.0
        %970 = vmatpush1.msra.mxu0 %v943
        %971 = vmatprep.subr.mxu0 0.0
        %972 = vmatpush1.msra.mxu0 %v944
        %973 = vmatprep.subr.mxu0 0.0
        %974 = vmatpush1.msra.mxu0 %v945
        %975 = vmatprep.subr.mxu0 0.0
        %976 = vmatpush1.msra.mxu0 %v946
        %977 = vmatprep.subr.mxu0 0.0
        %978 = vmatpush1.msra.mxu0 %v947
        %979 = vmatprep.subr.mxu0 0.0
        %980 = vmatpush1.msra.mxu0 %v948
        %981 = vmatprep.subr.mxu0 0.0
        %982 = vmatpush1.msra.mxu0 0.0
        %983 = vmatprep.subr.mxu0 0.0
        %984 = vmatpush1.msra.mxu0 0.0
        %985 = vmatprep.subr.mxu0 0.0
        %986 = vmatpush1.msra.mxu0 0.0
        %987 = vmatprep.subr.mxu0 0.0
        %988 = vmatpush1.msra.mxu0 0.0
        %989 = vmatprep.subr.mxu0 0.0
        %990 = vmatpush1.msra.mxu0 0.0
        %991 = vmatprep.subr.mxu0 0.0
        %992 = vmatpush1.msra.mxu0 0.0
        %993 = vmatprep.subr.mxu0 0.0
        %994 = vmatpush1.msra.mxu0 0.0
        %995 = vmatprep.subr.mxu0 0.0
        %996 = vmatpush1.msra.mxu0 0.0
        %997 = vmatprep.subr.mxu0 0.0
        %998 = vmatpush1.msra.mxu0 0.0
        %999 = vmatprep.subr.mxu0 0.0
        %1000 = vmatpush1.msra.mxu0 0.0
        %1001 = vmatprep.subr.mxu0 0.0
        %1002 = vmatpush1.msra.mxu0 0.0
        %1003 = vmatprep.subr.mxu0 0.0
        %1004 = vmatpush1.msra.mxu0 0.0
        %1005 = vmatprep.subr.mxu0 0.0
        %1006 = vmatpush1.msra.mxu0 0.0
        %1007 = vmatprep.subr.mxu0 0.0
        %1008 = vmatpush1.msra.mxu0 0.0
        %1009 = vmatprep.subr.mxu0 0.0
        %1010 = vmatpush1.msra.mxu0 0.0
        %1011 = vmatprep.subr.mxu0 0.0
        %1012 = vmatpush1.msra.mxu0 0.0
        %1013 = vmatprep.mubr.f32.mxu0 0.0
        %1014 = vmatmul.mubr.f32.gmra.mrb[0].mxu0 %v932
        %v1015 = vpop.f32.mrb[0].mxu0
        %v1016 = vadd.f32 0.0, %v1015
        %v1017 = vpop.f32.mrb[0].mxu0
        %1018 = vdwg.mxu0
        %vm1019 = vcmask 97280
        %1020 = vst.msk [vmem:[%s340] sm:$0xff] %vm1019, %v1016
        %s1021 = sand.u32 %s205, 1
        %s1022 = scalar_lea.sflag [#allocation4], %s1021
        %s1023 = sand.u32 %s205, 1
        %s1024 = smul.addr %s1023, 8
        %s1025 = scalar_lea.vmem [#allocation8], %s1024
        // Predicated region
        $region65: #{tpu_custom_call.1} parent=51 // pred_check
          %p1026 = pneg %p215
        $region66: #{tpu_custom_call.1} parent=51 // pred_check_branch
          %1028 = sbr.rel (%p1026) target = $region68
        $region67: #{tpu_custom_call.1} parent=51 // pred_region
          %s1030 = ssub.s32 128, 128
          %1031 = vsyncadd %s1022, %s1030
          %s1032 = smul.addr %s24, 128
          %s1033 = scalar_lea.hbm %s8, %s1032
          %s1035 = sshll.u32 %s1025, 4
          %s1036 = int_to_ptr.vmem [resolvable:$true] %s1035
          %1038 = dma.vmem_to_hbm [thread:$0]  %s1036, 128, %s1033, %s1022
        $region68: #{tpu_custom_call.1} parent=51 // pred_fallthru
          _
      $region52: #{tpu_custom_call.1} parent=5 // pred_fallthru
        _
      %p1039 = scmp.le.s32.totalorder 2, %s19
      // Predicated region
      $region69: #{tpu_custom_call.1} parent=5 // pred_check
        %p1040 = pneg %p1039
      $region70: #{tpu_custom_call.1} parent=5 // pred_check_branch
        %1042 = sbr.rel (%p1040) target = $region72
      $region71: #{tpu_custom_call.1} parent=5 // pred_region
        %s1043 = ssub.s32 %s19, 2
        // Predicated region
        $region73: #{tpu_custom_call.1} parent=71 // pred_check
          %p1044 = pneg %p221
        $region74: #{tpu_custom_call.1} parent=71 // pred_check_branch
          %1046 = sbr.rel (%p1044) target = $region76
        $region75: #{tpu_custom_call.1} parent=71 // pred_region
          %s1047 = sand.u32 %s206, 1
          %s1048 = scalar_lea.sflag [#allocation4], %s1047
          %s1049 = sand.u32 %s206, 1
          %s1050 = smul.addr %s1049, 8
          %s1051 = scalar_lea.vmem [#allocation8], %s1050
          %1052 = dma.done %s1048, 128
        $region76: #{tpu_custom_call.1} parent=71 // pred_fallthru
          _
      $region72: #{tpu_custom_call.1} parent=5 // pred_fallthru
        _
    $region6: #{tpu_custom_call.1} parent=1 // loop_footer
      %s23 = sadd.s32 1, %s19
    $region7: #{tpu_custom_call.1} parent=1 // loop_footer_branch
      %18 = sbr.rel target = $region3
    $region8: #{tpu_custom_call.1} parent=1 // loop_exit
      _
    %1053 = vsyncpa [#allocation3], 1
    %s1054 = scalar_lea.sflag [#allocation3], 1
    %1055 = vsyncpa %s1054, 1
    %1056 = vsyncpa [#allocation6], 1
    %1057 = vsyncpa [#allocation4], 1
    %s1058 = scalar_lea.sflag [#allocation4], 1
    %1059 = vsyncpa %s1058, 1

</llo_original>
